<compile_context>
chip_gen: v5e
topology: v5e:2x2
jax: 0.10.0
libtpu: 0.0.40
codegen_flags: <defaults>
</compile_context>

<pallas_src>
import functools
import math

import jax
import jax.numpy as jnp
from jax import lax
from jax.experimental import pallas as pl
from jax.experimental.pallas import tpu as pltpu


def _round_up(x: int, m: int) -> int:
    return ((x + m - 1) // m) * m


def _phys_vmem_bytes(rows: int, cols: int, dtype) -> int:
    """VMEM footprint of a (rows, cols) tile honoring physical (8*pack, 128) tiling."""
    itemsize = jnp.dtype(dtype).itemsize
    sublane = 8 * max(1, 4 // itemsize)  # f32 -> 8, bf16 -> 16, int8 -> 32 sublanes
    return _round_up(max(rows, 1), sublane) * _round_up(max(cols, 1), 128) * itemsize


def _vmem_capacity_bytes() -> int:
    """Generation-aware VMEM capacity; conservative (v7x = 64 MiB) fallback."""
    try:
        cap = int(getattr(pltpu.get_tpu_info(), "vmem_capacity_bytes", 0))
        if cap > 0:
            return cap
    except Exception:
        pass
    return 64 * 1024 * 1024


# -----------------------------------------------------------------------------
# Kernels
# -----------------------------------------------------------------------------
def _single_kernel(x_ref, w_ref, b_ref, o_ref):
    """Whole problem resident in VMEM: one fused matmul + bias, no grid."""
    o_ref[...] = (
        lax.dot_general(
            x_ref[...],
            w_ref[...],
            dimension_numbers=(((1,), (1,)), ((), ())),  # x @ W^T on the MXU
            preferred_element_type=jnp.float32,
        )
        + b_ref[...].astype(jnp.float32)
    )


def _ktiled_kernel(x_ref, w_ref, b_ref, o_ref, *, k_total, tk, mask_tail):
    """K-tiled reduction; accumulate into the resident f32 output block."""
    k = pl.program_id(0)

    @pl.when(k == 0)
    def _():
        # Fold the bias into the accumulator init (no separate epilogue add).
        o_ref[...] = jnp.broadcast_to(b_ref[...], o_ref.shape).astype(jnp.float32)

    x = x_ref[...]
    w = w_ref[...]
    if mask_tail:
        # Ragged last K-tile: the out-of-bounds tail of the edge block holds
        # unspecified padding — zero it (0 * NaN would otherwise poison the acc).
        rem = k_total % tk  # static python int > 0
        is_last = k == pl.num_programs(0) - 1
        col = lax.broadcasted_iota(jnp.int32, (1, tk), 1)
        valid = jnp.logical_or(jnp.logical_not(is_last), col < rem)
        x = jnp.where(valid, x, 0)
        w = jnp.where(valid, w, 0)

    o_ref[...] += lax.dot_general(
        x, w,
        dimension_numbers=(((1,), (1,)), ((), ())),  # contract K with K (trans-B)
        preferred_element_type=jnp.float32,
    )


def _ktiled_split_kernel(x_ref, w_ref, o_ref, *, k_total, tk, steps_per_core, mask_tail):
    """K reduction split across a leading 'parallel' axis into 2 partial slabs."""
    c = pl.program_id(0)
    k = pl.program_id(1)

    @pl.when(k == 0)
    def _():
        o_ref[...] = jnp.zeros_like(o_ref)

    x = x_ref[...]
    w = w_ref[...]
    if mask_tail:
        # Only the globally-last K block is ragged; the mask is identity elsewhere
        # (cheap VPU work, fully hidden under the weight DMA).
        gstart = (c * steps_per_core + k) * tk
        col = lax.broadcasted_iota(jnp.int32, (1, tk), 1) + gstart
        valid = col < k_total
        x = jnp.where(valid, x, 0)
        w = jnp.where(valid, w, 0)

    acc = lax.dot_general(
        x, w,
        dimension_numbers=(((1,), (1,)), ((), ())),
        preferred_element_type=jnp.float32,
    )
    o_ref[...] += acc[None]  # (B, N) -> (1, B, N)


# -----------------------------------------------------------------------------
# Wrapper
# -----------------------------------------------------------------------------
def coarse_block(x_nchw, weight, bias, *, tk=None, force_ktiled=False, core_split=None):
    """Equivalent of CoarseBlock.forward: Flatten + Linear.

    Args:
      x_nchw: [B, C, H, W] input.
      weight: [out_features, in_features] linear weight (torch layout, NOT transposed).
      bias:   [out_features] linear bias.
      tk:     optional K-tile override (multiple of 128) for the tiled path.
      force_ktiled: force the K-tiled path (used for testing).
      core_split: None/True to allow the 2-way core split of K, False to disable.
    Returns:
      [B, out_features] in x's dtype.
    """
    B = x_nchw.shape[0]
    K = math.prod(x_nchw.shape[1:])            # static python int
    N, k_w = weight.shape
    assert k_w == K, "Linear in_features must equal flattened size"

    x_flat = x_nchw.reshape(B, K)              # nn.Flatten (row-major, matches torch)
    b2 = bias.reshape(1, N)

    # Generation-aware budgets (v5e/v6e: 128 MiB VMEM; v7x: 64 MiB per TC).
    MiB = 1024 * 1024
    cap = _vmem_capacity_bytes()
    single_budget = int(min(max(cap // 6, 6 * MiB), 24 * MiB))
    tile_budget = int(min(max(cap // 4, 8 * MiB), 32 * MiB))
    vmem_limit = int(min(cap // 2, 64 * MiB))

    whole_bytes = (
        _phys_vmem_bytes(B, K, x_flat.dtype)
        + _phys_vmem_bytes(N, K, weight.dtype)
        + _phys_vmem_bytes(B, N, jnp.float32)
        + _phys_vmem_bytes(1, N, bias.dtype)
    )
    if not force_ktiled and whole_bytes <= single_budget:
        # Small/medium K: nothing to pipeline — single fused invocation.
        out = pl.pallas_call(
            _single_kernel,
            out_shape=jax.ShapeDtypeStruct((B, N), jnp.float32),
            compiler_params=pltpu.CompilerParams(vmem_limit_bytes=vmem_limit),
        )(x_flat, weight, b2)
        return out.astype(x_nchw.dtype)

    # ------------------------------------------------------------------ large K
    k_aligned = _round_up(K, 128)
    auto_tk = tk is None
    if auto_tk:
        # Size tk straight from the budget: double-buffered x & w tiles per
        # 128-column chunk + resident f32 output + bias, using physical tiling.
        fixed = _phys_vmem_bytes(B, N, jnp.float32) + _phys_vmem_bytes(1, N, bias.dtype)
        per_chunk = 2 * (
            _phys_vmem_bytes(B, 128, x_flat.dtype) + _phys_vmem_bytes(N, 128, weight.dtype)
        )
        chunks = max(1, (tile_budget - fixed) // per_chunk)
        tk = int(min(chunks * 128, k_aligned))
    assert tk % 128 == 0, "tk must be a multiple of 128"
    tk = min(tk, k_aligned)

    num_steps = -(-K // tk)

    # 2-way core split of the reduction (v7x has 2 TCs; harmless elsewhere).
    allow_split = core_split is None or core_split
    if allow_split and auto_tk and num_steps >= 2 and num_steps % 2 != 0:
        # Nudge tk down so the step count is even (no duplicated weight reads).
        tk_alt = _round_up(-(-K // (num_steps + 1)), 128)
        if tk_alt >= 128:
            ns_alt = -(-K // tk_alt)
            if ns_alt >= 2 and ns_alt % 2 == 0:
                tk, num_steps = tk_alt, ns_alt
    use_split = allow_split and num_steps >= 2 and num_steps % 2 == 0

    mask_tail = (K % tk) != 0   # ragged tail handled in-kernel (no weight jnp.pad)

    if use_split:
        steps_per_core = num_steps // 2
        kernel = functools.partial(
            _ktiled_split_kernel,
            k_total=K, tk=tk, steps_per_core=steps_per_core, mask_tail=mask_tail,
        )
        slabs = pl.pallas_call(
            kernel,
            out_shape=jax.ShapeDtypeStruct((2, B, N), jnp.float32),
            grid_spec=pltpu.PrefetchScalarGridSpec(
                num_scalar_prefetch=0,
                grid=(2, steps_per_core),
                in_specs=[
                    pl.BlockSpec((B, tk), lambda c, k: (0, c * steps_per_core + k)),
                    pl.BlockSpec((N, tk), lambda c, k: (0, c * steps_per_core + k)),
                ],
                out_specs=pl.BlockSpec((1, B, N), lambda c, k: (c, 0, 0)),
            ),
            compiler_params=pltpu.CompilerParams(
                dimension_semantics=("parallel", "arbitrary"),
                vmem_limit_bytes=vmem_limit,
            ),
        )(x_flat, weight)
        out = slabs[0] + slabs[1] + b2   # tiny (B, N) epilogue add + bias
        return out.astype(x_nchw.dtype)

    kernel = functools.partial(_ktiled_kernel, k_total=K, tk=tk, mask_tail=mask_tail)
    out = pl.pallas_call(
        kernel,
        out_shape=jax.ShapeDtypeStruct((B, N), jnp.float32),
        grid_spec=pltpu.PrefetchScalarGridSpec(
            num_scalar_prefetch=0,
            grid=(num_steps,),
            in_specs=[
                pl.BlockSpec((B, tk), lambda k: (0, k)),   # activation K-tile
                pl.BlockSpec((N, tk), lambda k: (0, k)),   # weight[N, K] K-tile (lane-dense)
                pl.BlockSpec((1, N), lambda k: (0, 0)),    # bias (resident)
            ],
            out_specs=pl.BlockSpec((B, N), lambda k: (0, 0)),  # resident accumulator
        ),
        compiler_params=pltpu.CompilerParams(
            dimension_semantics=("arbitrary",),            # K is a reduction axis
            vmem_limit_bytes=vmem_limit,
        ),
    )(x_flat, weight, b2)
    return out.astype(x_nchw.dtype)


# -----------------------------------------------------------------------------
# Self-test
# -----------------------------------------------------------------------------
if __name__ == "__main__":
    key = jax.random.PRNGKey(0)
    k_x, k_w, k_b = jax.random.split(key, 3)

    # Small shapes consistent with CoarseBlock(in_channels=C*H*W, out_channels=32).
    B, C, H, W = 2, 4, 16, 16
    in_features = C * H * W          # 1024 (Flatten output)
    out_features = 32

    x = jax.random.normal(k_x, (B, C, H, W), dtype=jnp.float32)

    # nn.Linear default init: U(-1/sqrt(in), 1/sqrt(in)).
    bound = 1.0 / math.sqrt(in_features)
    weight = jax.random.uniform(
        k_w, (out_features, in_features), minval=-bound, maxval=bound, dtype=jnp.float32
    )
    bias = jax.random.uniform(
        k_b, (out_features,), minval=-bound, maxval=bound, dtype=jnp.float32
    )

    y_ref = x.reshape(B, -1) @ weight.T + bias

    # 1) Default path (single fused call — what these shapes should use).
    y = coarse_block(x, weight, bias)
    jax.block_until_ready(y)
    assert y.shape == (B, out_features)
    assert jnp.allclose(y, y_ref, atol=1e-4, rtol=1e-4)

    # 2) K-tiled path, K % tk == 0, even steps -> 2-way core split (grid (2, 2)).
    y2 = coarse_block(x, weight, bias, tk=256, force_ktiled=True)
    jax.block_until_ready(y2)
    assert jnp.allclose(y2, y_ref, atol=1e-4, rtol=1e-4)

    # 3) Ragged last K-tile (K % tk != 0) handled by in-kernel masking, split path.
    y3 = coarse_block(x, weight, bias, tk=768, force_ktiled=True)
    jax.block_until_ready(y3)
    assert jnp.allclose(y3, y_ref, atol=1e-4, rtol=1e-4)

    # 4) Ragged last K-tile, single-axis reduction path (no core split).
    y4 = coarse_block(x, weight, bias, tk=768, force_ktiled=True, core_split=False)
    jax.block_until_ready(y4)
    assert jnp.allclose(y4, y_ref, atol=1e-4, rtol=1e-4)

    print("KERNEL_OK")
</pallas_src>

<mosaic_0001>
module attributes {stable_mosaic.version = 11 : i64} {
  func.func @_single_kernel(%arg0: memref<2x1024xf32, #tpu.memory_space<vmem>>, %arg1: memref<32x1024xf32, #tpu.memory_space<vmem>>, %arg2: memref<1x32xf32, #tpu.memory_space<vmem>>, %arg3: memref<2x32xf32, #tpu.memory_space<vmem>>) attributes {dimension_semantics = [], scalar_prefetch = 0 : i64, scratch_operands = 0 : i64, tpu.core_type = #tpu.core_type<tc>} {
    %c0 = arith.constant 0 : index
    %c0_0 = arith.constant 0 : index
    %0 = vector.load %arg0[%c0, %c0_0] : memref<2x1024xf32, #tpu.memory_space<vmem>>, vector<2x1024xf32>
    %c0_1 = arith.constant 0 : index
    %c0_2 = arith.constant 0 : index
    %1 = vector.load %arg1[%c0_1, %c0_2] : memref<32x1024xf32, #tpu.memory_space<vmem>>, vector<32x1024xf32>
    %cst = arith.constant dense<0.000000e+00> : vector<2x32xf32>
    %2 = tpu.matmul %0, %1, %cst {dimension_numbers = #tpu.dot_dimension_numbers<[1], [1], [0], [0], [0, 0, 1, 0], [], []>} : vector<2x1024xf32>, vector<32x1024xf32>, vector<2x32xf32> -> vector<2x32xf32>
    %c0_3 = arith.constant 0 : index
    %c0_4 = arith.constant 0 : index
    %3 = vector.load %arg2[%c0_3, %c0_4] : memref<1x32xf32, #tpu.memory_space<vmem>>, vector<1x32xf32>
    %4 = vector.broadcast %3 : vector<1x32xf32> to vector<2x32xf32>
    %5 = arith.addf %2, %4 : vector<2x32xf32>
    %c0_5 = arith.constant 0 : index
    %c0_6 = arith.constant 0 : index
    %6 = vector.load %arg3[%c0_5, %c0_6] : memref<2x32xf32, #tpu.memory_space<vmem>>, vector<2x32xf32>
    tpu.vector_store %arg3[%c0_5, %c0_6], %5 {strides = array<i32>} : memref<2x32xf32, #tpu.memory_space<vmem>>, vector<2x32xf32>,
    return
  }
}

</mosaic_0001>

<llo_original>
// kernel: tpu_custom_call.1
$region0: #{tpu_custom_call.1}
  #allocation0 [shape = 'u32[]', space=smem, size = 0x4, offset = 0x4, fixed_abs, tag = 'smem constant byte address 0x4 - core index']
  #allocation1 [shape = 'u32[72,128]{1,0:T(1,128)}', space=vmem, size = 0x9000, scoped, tag = 'internal scratch']
  %s0 = inlined_call_operand.hbm [shape: f32[2,1024], index: 0, kind: input, shape index: {}]
  %s1 = inlined_call_operand.hbm [shape: f32[32,1024], index: 1, kind: input, shape index: {}]
  %s2 = inlined_call_operand.vmem [shape: f32[1,32], index: 2, kind: input, shape index: {}]
  %s3 = inlined_call_operand.hbm [shape: f32[2,32], index: 3, kind: output, shape index: {}]
  %s4 = sld [smem:[#allocation0]]
  $region30: #{tpu_custom_call.1} parent=0
    _
  %s6 = ssub.s32 1, %s4
  %s7 = scalar_select 0, %s6, %s4
  $region1: #{tpu_custom_call.1} parent=0
    #allocation2 [shape = 'u8[8192]{0}', space=vmem, size = 0x2000, scoped, tag = 'input window, operand 0, single buffered']
    #allocation3 [shape = 's32[1]{0}', space=sflag, size = 0x4, scoped, tag = 'scoped memory for tpu_custom_call.1']
    #allocation4 [shape = 's32[1]{0}', space=sflag, size = 0x4, scoped, tag = 'scoped memory for tpu_custom_call.1']
    #allocation5 [shape = 'u8[131072]{0}', space=vmem, size = 0x20000, scoped, tag = 'input window, operand 1, single buffered']
    #allocation6 [shape = 's32[1]{0}', space=sflag, size = 0x4, scoped, tag = 'scoped memory for tpu_custom_call.1']
    #allocation7 [shape = 'u8[1024]{0}', space=vmem, size = 0x400, scoped, tag = 'output window, operand 0, single buffered']
    %8 = vsyncpa [#allocation3], 0
    %9 = vsyncpa [#allocation6], 0
    %10 = vsyncpa [#allocation4], 0
    // Predicated region
    $region2: #{tpu_custom_call.1} parent=1 // pred_check
      _
    $region3: #{tpu_custom_call.1} parent=1 // pred_check_branch
      %12 = sbr.rel (0) target = $region5
    $region4: #{tpu_custom_call.1} parent=1 // pred_region
      %14 = vsyncadd [#allocation3], 0
      %s16 = sshll.u32 %s0, 4
      %s17 = int_to_ptr.hbm [resolvable:$true] %s16
      %s18 = sshll.u32 [#allocation2], 4
      %s19 = int_to_ptr.vmem [resolvable:$true] %s18
      %21 = dma.hbm_to_vmem [thread:$0]  %s17, 256, %s19, [#allocation3]
    $region5: #{tpu_custom_call.1} parent=1 // pred_fallthru
      _
    // Predicated region
    $region6: #{tpu_custom_call.1} parent=1 // pred_check
      _
    $region7: #{tpu_custom_call.1} parent=1 // pred_check_branch
      %23 = sbr.rel (0) target = $region9
    $region8: #{tpu_custom_call.1} parent=1 // pred_region
      %25 = vsyncadd [#allocation6], 0
      %s26 = sshll.u32 %s1, 4
      %s27 = int_to_ptr.hbm [resolvable:$true] %s26
      %s28 = sshll.u32 [#allocation5], 4
      %s29 = int_to_ptr.vmem [resolvable:$true] %s28
      %34 = dma.hbm_to_vmem [thread:$0]  %s27, 4096, %s29, [#allocation6], 1024, 1024, 64
    $region9: #{tpu_custom_call.1} parent=1 // pred_fallthru
      _
    // Predicated region
    $region10: #{tpu_custom_call.1} parent=1 // pred_check
      _
    $region11: #{tpu_custom_call.1} parent=1 // pred_check_branch
      %36 = sbr.rel (0) target = $region13
    $region12: #{tpu_custom_call.1} parent=1 // pred_region
      _
    $region13: #{tpu_custom_call.1} parent=1 // pred_fallthru
      _
    // Predicated region
    $region14: #{tpu_custom_call.1} parent=1 // pred_check
      _
    $region15: #{tpu_custom_call.1} parent=1 // pred_check_branch
      %38 = sbr.rel (0) target = $region17
    $region16: #{tpu_custom_call.1} parent=1 // pred_region
      %40 = dma.done [#allocation3], 256
    $region17: #{tpu_custom_call.1} parent=1 // pred_fallthru
      _
    // Predicated region
    $region18: #{tpu_custom_call.1} parent=1 // pred_check
      _
    $region19: #{tpu_custom_call.1} parent=1 // pred_check_branch
      %42 = sbr.rel (0) target = $region21
    $region20: #{tpu_custom_call.1} parent=1 // pred_region
      %44 = dma.done [#allocation6], 4096
    $region21: #{tpu_custom_call.1} parent=1 // pred_fallthru
      _
    %v45 = vld [vmem:[#allocation2] sm:$0xff]
    %v46 = vld [vmem:[#allocation2 + $0x8] sm:$0xff]
    %v47 = vld [vmem:[#allocation5] sm:$0xff]
    %v48 = vld [vmem:[#allocation5 + $0x8] sm:$0xff]
    %v49 = vld [vmem:[#allocation5 + $0x10] sm:$0xff]
    %v50 = vld [vmem:[#allocation5 + $0x18] sm:$0xff]
    %v51 = vld [vmem:[#allocation5 + $0x20] sm:$0xff]
    %v52 = vld [vmem:[#allocation5 + $0x28] sm:$0xff]
    %v53 = vld [vmem:[#allocation5 + $0x30] sm:$0xff]
    %v54 = vld [vmem:[#allocation5 + $0x38] sm:$0xff]
    %v55 = vld [vmem:[#allocation5 + $0x40] sm:$0xff]
    %v56 = vld [vmem:[#allocation5 + $0x48] sm:$0xff]
    %v57 = vld [vmem:[#allocation5 + $0x50] sm:$0xff]
    %v58 = vld [vmem:[#allocation5 + $0x58] sm:$0xff]
    %v59 = vld [vmem:[#allocation5 + $0x60] sm:$0xff]
    %v60 = vld [vmem:[#allocation5 + $0x68] sm:$0xff]
    %v61 = vld [vmem:[#allocation5 + $0x70] sm:$0xff]
    %v62 = vld [vmem:[#allocation5 + $0x78] sm:$0xff]
    %v63 = vld [vmem:[#allocation5 + $0x80] sm:$0xff]
    %v64 = vld [vmem:[#allocation5 + $0x88] sm:$0xff]
    %v65 = vld [vmem:[#allocation5 + $0x90] sm:$0xff]
    %v66 = vld [vmem:[#allocation5 + $0x98] sm:$0xff]
    %v67 = vld [vmem:[#allocation5 + $0xa0] sm:$0xff]
    %v68 = vld [vmem:[#allocation5 + $0xa8] sm:$0xff]
    %v69 = vld [vmem:[#allocation5 + $0xb0] sm:$0xff]
    %v70 = vld [vmem:[#allocation5 + $0xb8] sm:$0xff]
    %v71 = vld [vmem:[#allocation5 + $0xc0] sm:$0xff]
    %v72 = vld [vmem:[#allocation5 + $0xc8] sm:$0xff]
    %v73 = vld [vmem:[#allocation5 + $0xd0] sm:$0xff]
    %v74 = vld [vmem:[#allocation5 + $0xd8] sm:$0xff]
    %v75 = vld [vmem:[#allocation5 + $0xe0] sm:$0xff]
    %v76 = vld [vmem:[#allocation5 + $0xe8] sm:$0xff]
    %v77 = vld [vmem:[#allocation5 + $0xf0] sm:$0xff]
    %v78 = vld [vmem:[#allocation5 + $0xf8] sm:$0xff]
    %v79 = vld [vmem:[%s2] sm:$0x1]
    %v81 = vperm.slane %v79, 0
    %85 = vst [vmem:[#allocation1] ss:$4 sm:$0xff] %v45
    %s86 = scalar_lea.vmem [#allocation1], 32
    %87 = vst [vmem:[%s86] ss:$4 sm:$0xff] %v46
    %v88 = vld.sshfl [vmem:[#allocation1] sm:$0xff pattern:$0x73625140]
    %v89 = vld.sshfl [vmem:[#allocation1 + $0x8] sm:$0xff pattern:$0x73625140]
    %v90 = vld.sshfl [vmem:[#allocation1 + $0x10] sm:$0xff pattern:$0x73625140]
    %v91 = vld.sshfl [vmem:[#allocation1 + $0x18] sm:$0xff pattern:$0x73625140]
    %v92 = vld.sshfl [vmem:[#allocation1 + $0x20] sm:$0xff pattern:$0x73625140]
    %v93 = vld.sshfl [vmem:[#allocation1 + $0x28] sm:$0xff pattern:$0x73625140]
    %v94 = vld.sshfl [vmem:[#allocation1 + $0x30] sm:$0xff pattern:$0x73625140]
    %v95 = vld.sshfl [vmem:[#allocation1 + $0x38] sm:$0xff pattern:$0x73625140]
    %104 = vmatpush.xpose.msra.mxu0 0.0
    %105 = vmatpush.xpose.msra.mxu0 0.0
    %106 = vmatpush.xpose.msra.mxu0 0.0
    %107 = vmatpush.xpose.msra.mxu0 0.0
    %108 = vmatpush.xpose.msra.mxu0 0.0
    %109 = vmatpush.xpose.msra.mxu0 0.0
    %110 = vmatpush.xpose.msra.mxu0 0.0
    %111 = vmatpush.xpose.msra.mxu0 0.0
    %112 = vmatpush.xpose.msra.mxu0 0.0
    %113 = vmatpush.xpose.msra.mxu0 0.0
    %114 = vmatpush.xpose.msra.mxu0 0.0
    %115 = vmatpush.xpose.msra.mxu0 0.0
    %116 = vmatpush.xpose.msra.mxu0 %v71
    %117 = vmatpush.xpose.msra.mxu0 %v63
    %118 = vmatpush.xpose.msra.mxu0 %v55
    %119 = vmatpush.xpose.msra.mxu0 %v47
    %120 = vmatmul.f32.gmra.mxu0 %v88
    %v121 = vpop.f32.mrf.mxu0
    %v122 = vadd.f32 %v81, %v121
    %123 = vdwg.mxu0
    %124 = vmatpush.xpose.msra.mxu0 0.0
    %125 = vmatpush.xpose.msra.mxu0 0.0
    %126 = vmatpush.xpose.msra.mxu0 0.0
    %127 = vmatpush.xpose.msra.mxu0 0.0
    %128 = vmatpush.xpose.msra.mxu0 0.0
    %129 = vmatpush.xpose.msra.mxu0 0.0
    %130 = vmatpush.xpose.msra.mxu0 0.0
    %131 = vmatpush.xpose.msra.mxu0 0.0
    %132 = vmatpush.xpose.msra.mxu0 0.0
    %133 = vmatpush.xpose.msra.mxu0 0.0
    %134 = vmatpush.xpose.msra.mxu0 0.0
    %135 = vmatpush.xpose.msra.mxu0 0.0
    %136 = vmatpush.xpose.msra.mxu0 %v72
    %137 = vmatpush.xpose.msra.mxu0 %v64
    %138 = vmatpush.xpose.msra.mxu0 %v56
    %139 = vmatpush.xpose.msra.mxu0 %v48
    %140 = vmatmul.f32.gmra.mxu0 %v89
    %v141 = vpop.f32.mrf.mxu0
    %v142 = vadd.f32 %v122, %v141
    %143 = vdwg.mxu0
    %144 = vmatpush.xpose.msra.mxu0 0.0
    %145 = vmatpush.xpose.msra.mxu0 0.0
    %146 = vmatpush.xpose.msra.mxu0 0.0
    %147 = vmatpush.xpose.msra.mxu0 0.0
    %148 = vmatpush.xpose.msra.mxu0 0.0
    %149 = vmatpush.xpose.msra.mxu0 0.0
    %150 = vmatpush.xpose.msra.mxu0 0.0
    %151 = vmatpush.xpose.msra.mxu0 0.0
    %152 = vmatpush.xpose.msra.mxu0 0.0
    %153 = vmatpush.xpose.msra.mxu0 0.0
    %154 = vmatpush.xpose.msra.mxu0 0.0
    %155 = vmatpush.xpose.msra.mxu0 0.0
    %156 = vmatpush.xpose.msra.mxu0 %v73
    %157 = vmatpush.xpose.msra.mxu0 %v65
    %158 = vmatpush.xpose.msra.mxu0 %v57
    %159 = vmatpush.xpose.msra.mxu0 %v49
    %160 = vmatmul.f32.gmra.mxu0 %v90
    %v161 = vpop.f32.mrf.mxu0
    %v162 = vadd.f32 %v142, %v161
    %163 = vdwg.mxu0
    %164 = vmatpush.xpose.msra.mxu0 0.0
    %165 = vmatpush.xpose.msra.mxu0 0.0
    %166 = vmatpush.xpose.msra.mxu0 0.0
    %167 = vmatpush.xpose.msra.mxu0 0.0
    %168 = vmatpush.xpose.msra.mxu0 0.0
    %169 = vmatpush.xpose.msra.mxu0 0.0
    %170 = vmatpush.xpose.msra.mxu0 0.0
    %171 = vmatpush.xpose.msra.mxu0 0.0
    %172 = vmatpush.xpose.msra.mxu0 0.0
    %173 = vmatpush.xpose.msra.mxu0 0.0
    %174 = vmatpush.xpose.msra.mxu0 0.0
    %175 = vmatpush.xpose.msra.mxu0 0.0
    %176 = vmatpush.xpose.msra.mxu0 %v74
    %177 = vmatpush.xpose.msra.mxu0 %v66
    %178 = vmatpush.xpose.msra.mxu0 %v58
    %179 = vmatpush.xpose.msra.mxu0 %v50
    %180 = vmatmul.f32.gmra.mxu0 %v91
    %v181 = vpop.f32.mrf.mxu0
    %v182 = vadd.f32 %v162, %v181
    %183 = vdwg.mxu0
    %184 = vmatpush.xpose.msra.mxu0 0.0
    %185 = vmatpush.xpose.msra.mxu0 0.0
    %186 = vmatpush.xpose.msra.mxu0 0.0
    %187 = vmatpush.xpose.msra.mxu0 0.0
    %188 = vmatpush.xpose.msra.mxu0 0.0
    %189 = vmatpush.xpose.msra.mxu0 0.0
    %190 = vmatpush.xpose.msra.mxu0 0.0
    %191 = vmatpush.xpose.msra.mxu0 0.0
    %192 = vmatpush.xpose.msra.mxu0 0.0
    %193 = vmatpush.xpose.msra.mxu0 0.0
    %194 = vmatpush.xpose.msra.mxu0 0.0
    %195 = vmatpush.xpose.msra.mxu0 0.0
    %196 = vmatpush.xpose.msra.mxu0 %v75
    %197 = vmatpush.xpose.msra.mxu0 %v67
    %198 = vmatpush.xpose.msra.mxu0 %v59
    %199 = vmatpush.xpose.msra.mxu0 %v51
    %200 = vmatmul.f32.gmra.mxu0 %v92
    %v201 = vpop.f32.mrf.mxu0
    %v202 = vadd.f32 %v182, %v201
    %203 = vdwg.mxu0
    %204 = vmatpush.xpose.msra.mxu0 0.0
    %205 = vmatpush.xpose.msra.mxu0 0.0
    %206 = vmatpush.xpose.msra.mxu0 0.0
    %207 = vmatpush.xpose.msra.mxu0 0.0
    %208 = vmatpush.xpose.msra.mxu0 0.0
    %209 = vmatpush.xpose.msra.mxu0 0.0
    %210 = vmatpush.xpose.msra.mxu0 0.0
    %211 = vmatpush.xpose.msra.mxu0 0.0
    %212 = vmatpush.xpose.msra.mxu0 0.0
    %213 = vmatpush.xpose.msra.mxu0 0.0
    %214 = vmatpush.xpose.msra.mxu0 0.0
    %215 = vmatpush.xpose.msra.mxu0 0.0
    %216 = vmatpush.xpose.msra.mxu0 %v76
    %217 = vmatpush.xpose.msra.mxu0 %v68
    %218 = vmatpush.xpose.msra.mxu0 %v60
    %219 = vmatpush.xpose.msra.mxu0 %v52
    %220 = vmatmul.f32.gmra.mxu0 %v93
    %v221 = vpop.f32.mrf.mxu0
    %v222 = vadd.f32 %v202, %v221
    %223 = vdwg.mxu0
    %224 = vmatpush.xpose.msra.mxu0 0.0
    %225 = vmatpush.xpose.msra.mxu0 0.0
    %226 = vmatpush.xpose.msra.mxu0 0.0
    %227 = vmatpush.xpose.msra.mxu0 0.0
    %228 = vmatpush.xpose.msra.mxu0 0.0
    %229 = vmatpush.xpose.msra.mxu0 0.0
    %230 = vmatpush.xpose.msra.mxu0 0.0
    %231 = vmatpush.xpose.msra.mxu0 0.0
    %232 = vmatpush.xpose.msra.mxu0 0.0
    %233 = vmatpush.xpose.msra.mxu0 0.0
    %234 = vmatpush.xpose.msra.mxu0 0.0
    %235 = vmatpush.xpose.msra.mxu0 0.0
    %236 = vmatpush.xpose.msra.mxu0 %v77
    %237 = vmatpush.xpose.msra.mxu0 %v69
    %238 = vmatpush.xpose.msra.mxu0 %v61
    %239 = vmatpush.xpose.msra.mxu0 %v53
    %240 = vmatmul.f32.gmra.mxu0 %v94
    %v241 = vpop.f32.mrf.mxu0
    %v242 = vadd.f32 %v222, %v241
    %243 = vdwg.mxu0
    %244 = vmatpush.xpose.msra.mxu0 0.0
    %245 = vmatpush.xpose.msra.mxu0 0.0
    %246 = vmatpush.xpose.msra.mxu0 0.0
    %247 = vmatpush.xpose.msra.mxu0 0.0
    %248 = vmatpush.xpose.msra.mxu0 0.0
    %249 = vmatpush.xpose.msra.mxu0 0.0
    %250 = vmatpush.xpose.msra.mxu0 0.0
    %251 = vmatpush.xpose.msra.mxu0 0.0
    %252 = vmatpush.xpose.msra.mxu0 0.0
    %253 = vmatpush.xpose.msra.mxu0 0.0
    %254 = vmatpush.xpose.msra.mxu0 0.0
    %255 = vmatpush.xpose.msra.mxu0 0.0
    %256 = vmatpush.xpose.msra.mxu0 %v78
    %257 = vmatpush.xpose.msra.mxu0 %v70
    %258 = vmatpush.xpose.msra.mxu0 %v62
    %259 = vmatpush.xpose.msra.mxu0 %v54
    %260 = vmatmul.f32.gmra.mxu0 %v95
    %v261 = vpop.f32.mrf.mxu0
    %v262 = vadd.f32 %v242, %v261
    %263 = vdwg.mxu0
    %vm264 = vcmask 254976
    %265 = vst.msk [vmem:[#allocation7] sm:$0x3] %vm264, %v262
    // Predicated region
    $region22: #{tpu_custom_call.1} parent=1 // pred_check
      _
    $region23: #{tpu_custom_call.1} parent=1 // pred_check_branch
      %267 = sbr.rel (0) target = $region25
    $region24: #{tpu_custom_call.1} parent=1 // pred_region
      %269 = vsyncadd [#allocation4], 0
      %s271 = sshll.u32 [#allocation7], 4
      %s272 = int_to_ptr.vmem [resolvable:$true] %s271
      %s273 = sshll.u32 %s3, 4
      %s274 = int_to_ptr.hbm [resolvable:$true] %s273
      %276 = dma.vmem_to_hbm [thread:$0]  %s272, 32, %s274, [#allocation4]
    $region25: #{tpu_custom_call.1} parent=1 // pred_fallthru
      _
    // Predicated region
    $region26: #{tpu_custom_call.1} parent=1 // pred_check
      _
    $region27: #{tpu_custom_call.1} parent=1 // pred_check_branch
      %278 = sbr.rel (0) target = $region29
    $region28: #{tpu_custom_call.1} parent=1 // pred_region
      %280 = dma.done [#allocation4], 32
    $region29: #{tpu_custom_call.1} parent=1 // pred_fallthru
      _
    %281 = vsyncpa [#allocation3], 1
    %282 = vsyncpa [#allocation6], 1
    %283 = vsyncpa [#allocation4], 1

</llo_original>
